<compile_context>
chip_gen: v5e
topology: v5e:2x2
jax: 0.10.0
libtpu: 0.0.40
codegen_flags: <defaults>
</compile_context>

<pallas_src>
import functools

import numpy as np
import jax
import jax.numpy as jnp
from jax.experimental import pallas as pl
from jax.experimental.pallas import tpu as pltpu


def _bessel_kernel(x_ref, o_ref, *, coef, prefactor, num_basis):
    # x_ref: (8, L)              -- distances, fully packed sublane x lane slab
    # o_ref: (num_basis, 8, L)   -- basis-major output block; o_ref[k] is a natively
    #                               tiled (8, L) slab -> full-width unmasked stores.
    x = x_ref[...]
    theta = coef * x                            # theta = (pi / r_max) * x

    # prefactor / x: EUP reciprocal seed + one Newton refinement (~1e-7 rel err).
    r = pl.reciprocal(x, approx=True)
    r = r * (2.0 - x * r)
    scale = prefactor * r

    # sin(k*theta) via the recurrence s_{k+1} = 2 cos(theta) * s_k - s_{k-1}.
    # The per-distance scale is folded into the seed (the recurrence is linear in s).
    c2 = 2.0 * jnp.cos(theta)
    s_km1 = jnp.sin(theta) * scale              # scale * sin(1 * theta)
    o_ref[0] = s_km1
    if num_basis > 1:
        s_k = c2 * s_km1                        # scale * sin(2 * theta)
        o_ref[1] = s_k
        for k in range(2, num_basis):
            s_kp1 = c2 * s_k - s_km1
            o_ref[k] = s_kp1
            s_km1, s_k = s_k, s_kp1


def bessel_basis(x, r_max, num_basis=8, *, tile_n=65536, edge_major=True):
    """Bessel radial basis (frozen weights), matching BesselBasis.forward.

    x: (N,) or (N, 1) float32 distances.
    Returns (N, num_basis) if edge_major else (num_basis, N).
    """
    # TODO(synk): trainable bessel_weights would need the generic sin(w*x) kernel; this
    # implements the default frozen buffer w_k = k * pi / r_max.
    x_flat = x.reshape(-1)
    n = x_flat.shape[0]
    coef = float(np.pi / r_max)
    prefactor = float(np.sqrt(2.0 / r_max))

    # Tile selection: big tiles (default 65536 distances = 2 MiB output block) to
    # amortize per-grid-step overhead, but keep >= 2 grid steps for large inputs so the
    # "parallel" axis can be sharded across v7x's two TensorCores.  Tiles are multiples
    # of 1024 distances (= 8 sublanes x 128 lanes).
    g = pl.cdiv(n, tile_n)
    if n > 32768:
        g = max(g, 2)
    tile_e = 1024 * pl.cdiv(pl.cdiv(n, g), 1024)
    n_pad = tile_e * g
    lanes = tile_e // 8

    # Pad with 1.0 so padded lanes never hit 0/0; padded columns are sliced off below.
    if n_pad != n:
        x_flat = jnp.pad(x_flat, (0, n_pad - n), constant_values=1.0)
    x2d = x_flat.reshape(n_pad // lanes, lanes)        # row-major view, free reshape

    kernel = functools.partial(_bessel_kernel, coef=coef, prefactor=prefactor,
                               num_basis=num_basis)

    out3 = pl.pallas_call(
        kernel,
        out_shape=jax.ShapeDtypeStruct((num_basis, n_pad // lanes, lanes), x_flat.dtype),
        grid_spec=pltpu.PrefetchScalarGridSpec(
            num_scalar_prefetch=0,
            grid=(g,),
            in_specs=[pl.BlockSpec((8, lanes), lambda i: (i, 0))],
            out_specs=pl.BlockSpec((num_basis, 8, lanes), lambda i: (0, i, 0)),
        ),
        compiler_params=pltpu.CompilerParams(
            dimension_semantics=("parallel",),
        ),
    )(x2d)

    # (num_basis, n_pad // lanes, lanes) -> (num_basis, N): free row-major reshape + slice.
    out_kn = out3.reshape(num_basis, n_pad)[:, :n]
    if not edge_major:
        return out_kn
    # TODO(synk): this transpose is a second HBM pass kept only to match the PyTorch
    # (N, num_basis) layout; consumers that accept basis-major output should pass
    # edge_major=False instead.
    return out_kn.T


def bessel_basis_ref(x, bessel_weights, prefactor):
    # Pure-JAX mirror of BesselBasis.forward.
    numerator = jnp.sin(bessel_weights * x)            # (N,1)*(nb,) -> (N, nb)
    return prefactor * (numerator / x)


if __name__ == "__main__":
    r_max = 10.0
    num_basis = 8

    # Frozen module parameters (match __init__).
    bessel_weights = (np.pi / r_max) * jnp.linspace(
        1.0, float(num_basis), num_basis, dtype=jnp.float32
    )
    prefactor = float(np.sqrt(2.0 / r_max))

    keys = jax.random.split(jax.random.PRNGKey(0), 3)

    # The recurrence-based sin matches direct evaluation to a few f32 ulps of the basis
    # magnitude (outputs reach ~prefactor/x ~ 4.5), hence atol=1e-5.
    rtol, atol = 1e-5, 1e-5

    # Case 1: N a multiple of 128.
    n1 = 256
    x1 = jax.random.uniform(keys[0], (n1, 1), dtype=jnp.float32, minval=0.1, maxval=r_max)
    out1 = jax.block_until_ready(bessel_basis(x1, r_max, num_basis))
    ref1 = bessel_basis_ref(x1, bessel_weights, prefactor)
    np.testing.assert_allclose(np.asarray(out1), np.asarray(ref1), rtol=rtol, atol=atol)

    # Case 2: ragged N (exercises the wrapper padding path).
    n2 = 200
    x2 = jax.random.uniform(keys[1], (n2, 1), dtype=jnp.float32, minval=0.1, maxval=r_max)
    out2 = jax.block_until_ready(bessel_basis(x2, r_max, num_basis))
    ref2 = bessel_basis_ref(x2, bessel_weights, prefactor)
    np.testing.assert_allclose(np.asarray(out2), np.asarray(ref2), rtol=rtol, atol=atol)

    # Case 3: small tile to exercise a multi-step grid + the basis-major (no-transpose) path.
    n3 = 2500
    x3 = jax.random.uniform(keys[2], (n3, 1), dtype=jnp.float32, minval=0.1, maxval=r_max)
    out3 = jax.block_until_ready(
        bessel_basis(x3, r_max, num_basis, tile_n=1024, edge_major=False)
    )
    ref3 = bessel_basis_ref(x3, bessel_weights, prefactor).T
    np.testing.assert_allclose(np.asarray(out3), np.asarray(ref3), rtol=rtol, atol=atol)

    print("KERNEL_OK")
</pallas_src>

<mosaic_0001>
module attributes {stable_mosaic.version = 11 : i64} {
  func.func @_bessel_kernel(%arg0: i32, %arg1: memref<8x128xf32, #tpu.memory_space<vmem>>, %arg2: memref<8x8x128xf32, #tpu.memory_space<vmem>>) attributes {dimension_semantics = [#tpu.dimension_semantics<parallel>], iteration_bounds = array<i64: 1>, scalar_prefetch = 0 : i64, scratch_operands = 0 : i64, tpu.core_type = #tpu.core_type<tc>, window_params = [{transform_indices = @transform_0, window_bounds = array<i64: 8, 128>}, {transform_indices = @transform_1, window_bounds = array<i64: 8, 8, 128>}]} {
    %c0 = arith.constant 0 : index
    %c0_0 = arith.constant 0 : index
    %0 = vector.load %arg1[%c0, %c0_0] : memref<8x128xf32, #tpu.memory_space<vmem>>, vector<8x128xf32>
    %cst = arith.constant 0.314159274 : f32
    %1 = vector.broadcast %cst : f32 to vector<8x128xf32>
    %2 = arith.mulf %1, %0 : vector<8x128xf32>
    %3 = tpu.reciprocal %0 {approx = true} : vector<8x128xf32> -> vector<8x128xf32>
    %4 = arith.mulf %0, %3 : vector<8x128xf32>
    %cst_1 = arith.constant 2.000000e+00 : f32
    %5 = vector.broadcast %cst_1 : f32 to vector<8x128xf32>
    %6 = arith.subf %5, %4 : vector<8x128xf32>
    %7 = arith.mulf %3, %6 : vector<8x128xf32>
    %cst_2 = arith.constant 0.44721359 : f32
    %8 = vector.broadcast %cst_2 : f32 to vector<8x128xf32>
    %9 = arith.mulf %8, %7 : vector<8x128xf32>
    %10 = math.cos %2 : vector<8x128xf32>
    %cst_3 = arith.constant 2.000000e+00 : f32
    %11 = vector.broadcast %cst_3 : f32 to vector<8x128xf32>
    %12 = arith.mulf %11, %10 : vector<8x128xf32>
    %13 = math.sin %2 : vector<8x128xf32>
    %14 = arith.mulf %13, %9 : vector<8x128xf32>
    %c0_4 = arith.constant 0 : index
    %c0_5 = arith.constant 0 : index
    %c0_6 = arith.constant 0 : index
    %15 = vector.load %arg2[%c0_4, %c0_5, %c0_6] : memref<8x8x128xf32, #tpu.memory_space<vmem>>, vector<1x8x128xf32>
    %16 = vector.shape_cast %15 : vector<1x8x128xf32> to vector<8x128xf32>
    %17 = vector.shape_cast %14 : vector<8x128xf32> to vector<1x8x128xf32>
    tpu.vector_store %arg2[%c0_4, %c0_5, %c0_6], %17 {strides = array<i32>} : memref<8x8x128xf32, #tpu.memory_space<vmem>>, vector<1x8x128xf32>,
    %18 = arith.mulf %12, %14 : vector<8x128xf32>
    %c1 = arith.constant 1 : index
    %c0_7 = arith.constant 0 : index
    %c0_8 = arith.constant 0 : index
    %19 = vector.load %arg2[%c1, %c0_7, %c0_8] : memref<8x8x128xf32, #tpu.memory_space<vmem>>, vector<1x8x128xf32>
    %20 = vector.shape_cast %19 : vector<1x8x128xf32> to vector<8x128xf32>
    %21 = vector.shape_cast %18 : vector<8x128xf32> to vector<1x8x128xf32>
    tpu.vector_store %arg2[%c1, %c0_7, %c0_8], %21 {strides = array<i32>} : memref<8x8x128xf32, #tpu.memory_space<vmem>>, vector<1x8x128xf32>,
    %22 = arith.mulf %12, %18 : vector<8x128xf32>
    %23 = arith.subf %22, %14 : vector<8x128xf32>
    %c2 = arith.constant 2 : index
    %c0_9 = arith.constant 0 : index
    %c0_10 = arith.constant 0 : index
    %24 = vector.load %arg2[%c2, %c0_9, %c0_10] : memref<8x8x128xf32, #tpu.memory_space<vmem>>, vector<1x8x128xf32>
    %25 = vector.shape_cast %24 : vector<1x8x128xf32> to vector<8x128xf32>
    %26 = vector.shape_cast %23 : vector<8x128xf32> to vector<1x8x128xf32>
    tpu.vector_store %arg2[%c2, %c0_9, %c0_10], %26 {strides = array<i32>} : memref<8x8x128xf32, #tpu.memory_space<vmem>>, vector<1x8x128xf32>,
    %27 = arith.mulf %12, %23 : vector<8x128xf32>
    %28 = arith.subf %27, %18 : vector<8x128xf32>
    %c3 = arith.constant 3 : index
    %c0_11 = arith.constant 0 : index
    %c0_12 = arith.constant 0 : index
    %29 = vector.load %arg2[%c3, %c0_11, %c0_12] : memref<8x8x128xf32, #tpu.memory_space<vmem>>, vector<1x8x128xf32>
    %30 = vector.shape_cast %29 : vector<1x8x128xf32> to vector<8x128xf32>
    %31 = vector.shape_cast %28 : vector<8x128xf32> to vector<1x8x128xf32>
    tpu.vector_store %arg2[%c3, %c0_11, %c0_12], %31 {strides = array<i32>} : memref<8x8x128xf32, #tpu.memory_space<vmem>>, vector<1x8x128xf32>,
    %32 = arith.mulf %12, %28 : vector<8x128xf32>
    %33 = arith.subf %32, %23 : vector<8x128xf32>
    %c4 = arith.constant 4 : index
    %c0_13 = arith.constant 0 : index
    %c0_14 = arith.constant 0 : index
    %34 = vector.load %arg2[%c4, %c0_13, %c0_14] : memref<8x8x128xf32, #tpu.memory_space<vmem>>, vector<1x8x128xf32>
    %35 = vector.shape_cast %34 : vector<1x8x128xf32> to vector<8x128xf32>
    %36 = vector.shape_cast %33 : vector<8x128xf32> to vector<1x8x128xf32>
    tpu.vector_store %arg2[%c4, %c0_13, %c0_14], %36 {strides = array<i32>} : memref<8x8x128xf32, #tpu.memory_space<vmem>>, vector<1x8x128xf32>,
    %37 = arith.mulf %12, %33 : vector<8x128xf32>
    %38 = arith.subf %37, %28 : vector<8x128xf32>
    %c5 = arith.constant 5 : index
    %c0_15 = arith.constant 0 : index
    %c0_16 = arith.constant 0 : index
    %39 = vector.load %arg2[%c5, %c0_15, %c0_16] : memref<8x8x128xf32, #tpu.memory_space<vmem>>, vector<1x8x128xf32>
    %40 = vector.shape_cast %39 : vector<1x8x128xf32> to vector<8x128xf32>
    %41 = vector.shape_cast %38 : vector<8x128xf32> to vector<1x8x128xf32>
    tpu.vector_store %arg2[%c5, %c0_15, %c0_16], %41 {strides = array<i32>} : memref<8x8x128xf32, #tpu.memory_space<vmem>>, vector<1x8x128xf32>,
    %42 = arith.mulf %12, %38 : vector<8x128xf32>
    %43 = arith.subf %42, %33 : vector<8x128xf32>
    %c6 = arith.constant 6 : index
    %c0_17 = arith.constant 0 : index
    %c0_18 = arith.constant 0 : index
    %44 = vector.load %arg2[%c6, %c0_17, %c0_18] : memref<8x8x128xf32, #tpu.memory_space<vmem>>, vector<1x8x128xf32>
    %45 = vector.shape_cast %44 : vector<1x8x128xf32> to vector<8x128xf32>
    %46 = vector.shape_cast %43 : vector<8x128xf32> to vector<1x8x128xf32>
    tpu.vector_store %arg2[%c6, %c0_17, %c0_18], %46 {strides = array<i32>} : memref<8x8x128xf32, #tpu.memory_space<vmem>>, vector<1x8x128xf32>,
    %47 = arith.mulf %12, %43 : vector<8x128xf32>
    %48 = arith.subf %47, %38 : vector<8x128xf32>
    %c7 = arith.constant 7 : index
    %c0_19 = arith.constant 0 : index
    %c0_20 = arith.constant 0 : index
    %49 = vector.load %arg2[%c7, %c0_19, %c0_20] : memref<8x8x128xf32, #tpu.memory_space<vmem>>, vector<1x8x128xf32>
    %50 = vector.shape_cast %49 : vector<1x8x128xf32> to vector<8x128xf32>
    %51 = vector.shape_cast %48 : vector<8x128xf32> to vector<1x8x128xf32>
    tpu.vector_store %arg2[%c7, %c0_19, %c0_20], %51 {strides = array<i32>} : memref<8x8x128xf32, #tpu.memory_space<vmem>>, vector<1x8x128xf32>,
    return
  }
  func.func @transform_0(%arg0: i32) -> (i32, i32) {
    %c0_i32 = arith.constant 0 : i32
    %c0_i32_0 = arith.constant 0 : i32
    return %arg0, %c0_i32 : i32, i32
  }
  func.func @transform_1(%arg0: i32) -> (i32, i32, i32) {
    %c0_i32 = arith.constant 0 : i32
    %c0_i32_0 = arith.constant 0 : i32
    %c0_i32_1 = arith.constant 0 : i32
    return %c0_i32, %arg0, %c0_i32_0 : i32, i32, i32
  }
}

</mosaic_0001>

<llo_original>
// kernel: tpu_custom_call.1
$region0: #{tpu_custom_call.1}
  #allocation0 [shape = 'u32[]', space=smem, size = 0x4, offset = 0x4, fixed_abs, tag = 'smem constant byte address 0x4 - core index']
  #allocation1 [shape = 'u32[72,128]{1,0:T(1,128)}', space=vmem, size = 0x9000, scoped, tag = 'internal scratch']
  %s0 = inlined_call_operand.hbm [shape: f32[8,128], index: 0, kind: input, shape index: {}]
  %s1 = inlined_call_operand.hbm [shape: f32[8,8,128], index: 1, kind: output, shape index: {}]
  %s2 = sld [smem:[#allocation0]]
  $region18: #{tpu_custom_call.1} parent=0
    _
  %s4 = ssub.s32 1, %s2
  %s5 = scalar_select 0, %s4, %s2
  $region1: #{tpu_custom_call.1} parent=0
    #allocation2 [shape = 'u8[4096]{0}', space=vmem, size = 0x1000, scoped, tag = 'input window, operand 0, single buffered']
    #allocation3 [shape = 's32[1]{0}', space=sflag, size = 0x4, scoped, tag = 'scoped memory for tpu_custom_call.1']
    #allocation4 [shape = 's32[1]{0}', space=sflag, size = 0x4, scoped, tag = 'scoped memory for tpu_custom_call.1']
    #allocation5 [shape = 'u8[32768]{0}', space=vmem, size = 0x8000, scoped, tag = 'output window, operand 0, single buffered']
    %6 = vsyncpa [#allocation3], 0
    %7 = vsyncpa [#allocation4], 0
    // Predicated region
    $region2: #{tpu_custom_call.1} parent=1 // pred_check
      _
    $region3: #{tpu_custom_call.1} parent=1 // pred_check_branch
      %9 = sbr.rel (0) target = $region5
    $region4: #{tpu_custom_call.1} parent=1 // pred_region
      %11 = vsyncadd [#allocation3], 0
      %s13 = sshll.u32 %s0, 4
      %s14 = int_to_ptr.hbm [resolvable:$true] %s13
      %s15 = sshll.u32 [#allocation2], 4
      %s16 = int_to_ptr.vmem [resolvable:$true] %s15
      %18 = dma.hbm_to_vmem [thread:$0]  %s14, 128, %s16, [#allocation3]
    $region5: #{tpu_custom_call.1} parent=1 // pred_fallthru
      _
    // Predicated region
    $region6: #{tpu_custom_call.1} parent=1 // pred_check
      _
    $region7: #{tpu_custom_call.1} parent=1 // pred_check_branch
      %20 = sbr.rel (0) target = $region9
    $region8: #{tpu_custom_call.1} parent=1 // pred_region
      %22 = dma.done [#allocation3], 128
    $region9: #{tpu_custom_call.1} parent=1 // pred_fallthru
      _
    %v23 = vld [vmem:[#allocation2] sm:$0xff]
    %v24 = vmul.f32 %v23, 0.31415927
    %v25 = vrcp.pop %v23
    %v26 = vmul.f32 %v23, %v25
    %v27 = vsub.f32 2.0, %v26
    %v28 = vmul.f32 %v25, %v27
    %v29 = vmul.f32 %v28, 0.4472136
    %v30 = vand.u32 2147483647, %v24
    %vm31 = vcmp.le.f32.partialorder %v30, 0.7853982
    %vm32 = vcmp.lt.s32.totalorder %v24, 0
    %v33 = vand.u32 %v24, 2139095040
    %v34 = vshrl.u32 %v33, 23
    %v35 = vsub.s32 %v34, 127
    %v36 = vand.u32 2147483647, %v24
    %v37 = vand.u32 %v36, 8388607
    %v38 = vor.u32 %v37, 8388608
    %v39 = vsub.s32 0, %v38
    %v40 = vadd.s32 %v35, 1
    %vm41 = vcmp.gt.s32.totalorder %v40, 0
    %v42 = vsel %vm41, %v40, 0
    %v43 = vshrl.u32 %v42, 5
    %v44 = vand.u32 %v42, 31
    %v45 = vsub.s32 32, %v44
    %v46 = vshrl.u32 683565275, %v45
    %v47 = vshll.u32 683565275, %v44
    %v48 = vshrl.u32 2475754826, %v45
    %v49 = vor.u32 %v47, %v48
    %v50 = vshll.u32 2475754826, %v44
    %v51 = vshrl.u32 2131351028, %v45
    %v52 = vor.u32 %v50, %v51
    %v53 = vshll.u32 2131351028, %v44
    %v54 = vshrl.u32 2102212464, %v45
    %v55 = vor.u32 %v53, %v54
    %v56 = vshll.u32 2102212464, %v44
    %v57 = vshrl.u32 920167782, %v45
    %v58 = vor.u32 %v56, %v57
    %v59 = vshll.u32 920167782, %v44
    %v60 = vshrl.u32 1326507024, %v45
    %v61 = vor.u32 %v59, %v60
    %vm62 = vcmp.lt.s32.totalorder %v43, 1
    %vm63 = vcmp.lt.s32.totalorder %v43, 2
    %vm64 = vcmp.lt.s32.totalorder %v43, 3
    %vm65 = vcmp.lt.s32.totalorder %v43, 4
    %v66 = vsel %vm62, %v46, %v49
    %v67 = vsel %vm65, %v55, 2102212464
    %v68 = vsel %vm64, %v52, %v67
    %v69 = vsel %vm63, %v66, %v68
    %v70 = vsel %vm62, %v49, %v52
    %v71 = vsel %vm65, %v58, 920167782
    %v72 = vsel %vm64, %v55, %v71
    %v73 = vsel %vm63, %v70, %v72
    %v74 = vsel %vm62, %v52, %v55
    %v75 = vsel %vm65, %v61, 1326507024
    %v76 = vsel %vm64, %v58, %v75
    %v77 = vsel %vm63, %v74, %v76
    %v78 = vshll.u32 %v38, 8
    %v79 = vand.u32 %v78, 65535
    %v80 = vshrl.u32 %v78, 16
    %v81 = vand.u32 %v77, 65535
    %v82 = vshrl.u32 %v77, 16
    %v83 = vmul.u32 %v79, %v81
    %v84 = vmul.u32 %v79, %v82
    %v85 = vmul.u32 %v80, %v81
    %v86 = vmul.u32 %v80, %v82
    %v87 = vshll.u32 %v84, 16
    %v88 = vshrl.u32 %v84, 16
    %v89 = vshll.u32 %v85, 16
    %v90 = vshrl.u32 %v85, 16
    %vm91 = vc.u32 %v83, %v87
    %v92 = vsel %vm91, 1, 0
    %v93 = vadd.s32 %v83, %v87
    %v94 = vadd.s32 %v86, %v92
    %vm95 = vc.u32 %v93, %v89
    %v96 = vsel %vm95, 1, 0
    %v97 = vadd.s32 %v93, %v89
    %v98 = vadd.s32 %v94, %v96
    %v99 = vadd.s32 %v98, %v88
    %v100 = vadd.s32 %v99, %v90
    %v101 = vand.u32 %v78, 65535
    %v102 = vshrl.u32 %v78, 16
    %v103 = vand.u32 %v73, 65535
    %v104 = vshrl.u32 %v73, 16
    %v105 = vmul.u32 %v101, %v103
    %v106 = vmul.u32 %v101, %v104
    %v107 = vmul.u32 %v102, %v103
    %v108 = vmul.u32 %v102, %v104
    %v109 = vshll.u32 %v106, 16
    %v110 = vshrl.u32 %v106, 16
    %v111 = vshll.u32 %v107, 16
    %v112 = vshrl.u32 %v107, 16
    %vm113 = vc.u32 %v105, %v109
    %v114 = vsel %vm113, 1, 0
    %v115 = vadd.s32 %v105, %v109
    %v116 = vadd.s32 %v108, %v114
    %vm117 = vc.u32 %v115, %v111
    %v118 = vsel %vm117, 1, 0
    %v119 = vadd.s32 %v115, %v111
    %v120 = vadd.s32 %v116, %v118
    %v121 = vadd.s32 %v120, %v110
    %v122 = vadd.s32 %v121, %v112
    %v123 = vmul.u32 %v78, %v69
    %v124 = vadd.s32 %v100, %v119
    %vm125 = vc.u32 %v100, %v119
    %v126 = vadd.s32 %v122, 1
    %v127 = vsel %vm125, %v126, %v122
    %v128 = vadd.s32 %v123, %v127
    %v129 = vadd.s32 %v128, 536870912
    %v130 = vshrl.u32 %v129, 30
    %v131 = vshll.u32 %v130, 30
    %v132 = vsub.s32 %v128, %v131
    %vm133 = vcmp.lt.s32.totalorder %v132, 0
    %v134 = vsub.s32 0, %v132
    %v135 = vsel %vm133, %v134, %v132
    %v136 = vclz %v135
    %v137 = vsub.s32 %v136, 2
    %vm138 = vcmp.gt.s32.totalorder 0, %v137
    %v139 = vsel %vm138, 0, %v137
    %v140 = vsub.s32 32, %v139
    %v141 = vshll.u32 %v132, %v139
    %v142 = vshrl.u32 %v124, %v140
    %v143 = vor.u32 %v141, %v142
    %v144 = vsub.s32 4294967266, %v139
    %v145 = vadd.s32 %v144, 127
    %v146 = vshll.u32 %v145, 23
    %v147 = vor.u32 4788187, %v146
    %v148 = vand.u32 2147483647, %v147
    %v150 = vcvt.s32.f32 %v143
    %v151 = vmul.f32 %v150, %v148
    %v152 = vxor.u32 %v151, 2147483648
    %v153 = vsel %vm32, %v152, %v151
    %v154 = vsub.s32 4, %v130
    %v155 = vsel %vm32, %v154, %v130
    %v156 = vsel %vm31, %v24, %v153
    %v157 = vsel %vm31, 0, %v155
    %v158 = vmul.f32 %v156, %v156
    %v159 = vmul.f32 %v158, -0.001358992
    %v160 = vadd.f32 %v159, 0.041655596
    %v161 = vmul.f32 %v158, %v160
    %v162 = vadd.f32 %v161, -0.4999988
    %v163 = vmul.f32 %v158, %v162
    %v164 = vadd.f32 1.0, %v163
    %v165 = vmul.f32 %v156, %v156
    %v166 = vmul.f32 %v165, -0.00019511016
    %v167 = vadd.f32 %v166, 0.008332121
    %v168 = vmul.f32 %v165, %v167
    %v169 = vadd.f32 %v168, -0.16666654
    %v170 = vmul.f32 %v165, %v169
    %v171 = vadd.f32 %v170, 1.0
    %v172 = vmul.f32 %v171, %v156
    %vm173 = vweird.f32 %v24
    %v174 = vand.u32 %v157, 3
    %vm175 = vcmp.lt.s32.totalorder %v174, 2
    %vm176 = vcmp.eq.s32.totalorder %v174, 0
    %v177 = vxor.u32 %v172, 2147483648
    %v178 = vsel %vm176, %v164, %v177
    %vm179 = vcmp.eq.s32.totalorder %v174, 2
    %v180 = vxor.u32 %v164, 2147483648
    %v181 = vsel %vm179, %v180, %v172
    %v182 = vsel %vm175, %v178, %v181
    %v183 = vsel %vm173, nan, %v182
    %v184 = vmul.f32 %v183, 2.0
    %v185 = vand.u32 2147483647, %v24
    %vm186 = vcmp.le.f32.partialorder %v185, 0.7853982
    %vm187 = vcmp.lt.s32.totalorder %v24, 0
    %v188 = vand.u32 %v24, 2139095040
    %v189 = vshrl.u32 %v188, 23
    %v190 = vsub.s32 %v189, 127
    %v191 = vand.u32 2147483647, %v24
    %v192 = vand.u32 %v191, 8388607
    %v193 = vor.u32 %v192, 8388608
    %v194 = vsub.s32 0, %v193
    %v195 = vadd.s32 %v190, 1
    %vm196 = vcmp.gt.s32.totalorder %v195, 0
    %v197 = vsel %vm196, %v195, 0
    %v198 = vshrl.u32 %v197, 5
    %v199 = vand.u32 %v197, 31
    %v200 = vsub.s32 32, %v199
    %v201 = vshrl.u32 683565275, %v200
    %v202 = vshll.u32 683565275, %v199
    %v203 = vshrl.u32 2475754826, %v200
    %v204 = vor.u32 %v202, %v203
    %v205 = vshll.u32 2475754826, %v199
    %v206 = vshrl.u32 2131351028, %v200
    %v207 = vor.u32 %v205, %v206
    %v208 = vshll.u32 2131351028, %v199
    %v209 = vshrl.u32 2102212464, %v200
    %v210 = vor.u32 %v208, %v209
    %v211 = vshll.u32 2102212464, %v199
    %v212 = vshrl.u32 920167782, %v200
    %v213 = vor.u32 %v211, %v212
    %v214 = vshll.u32 920167782, %v199
    %v215 = vshrl.u32 1326507024, %v200
    %v216 = vor.u32 %v214, %v215
    %vm217 = vcmp.lt.s32.totalorder %v198, 1
    %vm218 = vcmp.lt.s32.totalorder %v198, 2
    %vm219 = vcmp.lt.s32.totalorder %v198, 3
    %vm220 = vcmp.lt.s32.totalorder %v198, 4
    %v221 = vsel %vm217, %v201, %v204
    %v222 = vsel %vm220, %v210, 2102212464
    %v223 = vsel %vm219, %v207, %v222
    %v224 = vsel %vm218, %v221, %v223
    %v225 = vsel %vm217, %v204, %v207
    %v226 = vsel %vm220, %v213, 920167782
    %v227 = vsel %vm219, %v210, %v226
    %v228 = vsel %vm218, %v225, %v227
    %v229 = vsel %vm217, %v207, %v210
    %v230 = vsel %vm220, %v216, 1326507024
    %v231 = vsel %vm219, %v213, %v230
    %v232 = vsel %vm218, %v229, %v231
    %v233 = vshll.u32 %v193, 8
    %v234 = vand.u32 %v233, 65535
    %v235 = vshrl.u32 %v233, 16
    %v236 = vand.u32 %v232, 65535
    %v237 = vshrl.u32 %v232, 16
    %v238 = vmul.u32 %v234, %v236
    %v239 = vmul.u32 %v234, %v237
    %v240 = vmul.u32 %v235, %v236
    %v241 = vmul.u32 %v235, %v237
    %v242 = vshll.u32 %v239, 16
    %v243 = vshrl.u32 %v239, 16
    %v244 = vshll.u32 %v240, 16
    %v245 = vshrl.u32 %v240, 16
    %vm246 = vc.u32 %v238, %v242
    %v247 = vsel %vm246, 1, 0
    %v248 = vadd.s32 %v238, %v242
    %v249 = vadd.s32 %v241, %v247
    %vm250 = vc.u32 %v248, %v244
    %v251 = vsel %vm250, 1, 0
    %v252 = vadd.s32 %v248, %v244
    %v253 = vadd.s32 %v249, %v251
    %v254 = vadd.s32 %v253, %v243
    %v255 = vadd.s32 %v254, %v245
    %v256 = vand.u32 %v233, 65535
    %v257 = vshrl.u32 %v233, 16
    %v258 = vand.u32 %v228, 65535
    %v259 = vshrl.u32 %v228, 16
    %v260 = vmul.u32 %v256, %v258
    %v261 = vmul.u32 %v256, %v259
    %v262 = vmul.u32 %v257, %v258
    %v263 = vmul.u32 %v257, %v259
    %v264 = vshll.u32 %v261, 16
    %v265 = vshrl.u32 %v261, 16
    %v266 = vshll.u32 %v262, 16
    %v267 = vshrl.u32 %v262, 16
    %vm268 = vc.u32 %v260, %v264
    %v269 = vsel %vm268, 1, 0
    %v270 = vadd.s32 %v260, %v264
    %v271 = vadd.s32 %v263, %v269
    %vm272 = vc.u32 %v270, %v266
    %v273 = vsel %vm272, 1, 0
    %v274 = vadd.s32 %v270, %v266
    %v275 = vadd.s32 %v271, %v273
    %v276 = vadd.s32 %v275, %v265
    %v277 = vadd.s32 %v276, %v267
    %v278 = vmul.u32 %v233, %v224
    %v279 = vadd.s32 %v255, %v274
    %vm280 = vc.u32 %v255, %v274
    %v281 = vadd.s32 %v277, 1
    %v282 = vsel %vm280, %v281, %v277
    %v283 = vadd.s32 %v278, %v282
    %v284 = vadd.s32 %v283, 536870912
    %v285 = vshrl.u32 %v284, 30
    %v286 = vshll.u32 %v285, 30
    %v287 = vsub.s32 %v283, %v286
    %vm288 = vcmp.lt.s32.totalorder %v287, 0
    %v289 = vsub.s32 0, %v287
    %v290 = vsel %vm288, %v289, %v287
    %v291 = vclz %v290
    %v292 = vsub.s32 %v291, 2
    %vm293 = vcmp.gt.s32.totalorder 0, %v292
    %v294 = vsel %vm293, 0, %v292
    %v295 = vsub.s32 32, %v294
    %v296 = vshll.u32 %v287, %v294
    %v297 = vshrl.u32 %v279, %v295
    %v298 = vor.u32 %v296, %v297
    %v299 = vsub.s32 4294967266, %v294
    %v300 = vadd.s32 %v299, 127
    %v301 = vshll.u32 %v300, 23
    %v302 = vor.u32 4788187, %v301
    %v303 = vand.u32 2147483647, %v302
    %v305 = vcvt.s32.f32 %v298
    %v306 = vmul.f32 %v305, %v303
    %v307 = vxor.u32 %v306, 2147483648
    %v308 = vsel %vm187, %v307, %v306
    %v309 = vsub.s32 4, %v285
    %v310 = vsel %vm187, %v309, %v285
    %v311 = vsel %vm186, %v24, %v308
    %v312 = vsel %vm186, 0, %v310
    %v313 = vmul.f32 %v311, %v311
    %v314 = vmul.f32 %v313, -0.001358992
    %v315 = vadd.f32 %v314, 0.041655596
    %v316 = vmul.f32 %v313, %v315
    %v317 = vadd.f32 %v316, -0.4999988
    %v318 = vmul.f32 %v313, %v317
    %v319 = vadd.f32 1.0, %v318
    %v320 = vmul.f32 %v311, %v311
    %v321 = vmul.f32 %v320, -0.00019511016
    %v322 = vadd.f32 %v321, 0.008332121
    %v323 = vmul.f32 %v320, %v322
    %v324 = vadd.f32 %v323, -0.16666654
    %v325 = vmul.f32 %v320, %v324
    %v326 = vadd.f32 %v325, 1.0
    %v327 = vmul.f32 %v326, %v311
    %vm328 = vweird.f32 %v24
    %v329 = vadd.s32 %v312, 3
    %v330 = vand.u32 %v329, 3
    %vm331 = vcmp.lt.s32.totalorder %v330, 2
    %vm332 = vcmp.eq.s32.totalorder %v330, 0
    %v333 = vxor.u32 %v327, 2147483648
    %v334 = vsel %vm332, %v319, %v333
    %vm335 = vcmp.eq.s32.totalorder %v330, 2
    %v336 = vxor.u32 %v319, 2147483648
    %v337 = vsel %vm335, %v336, %v327
    %v338 = vsel %vm331, %v334, %v337
    %v339 = vsel %vm328, nan, %v338
    %v340 = vmul.f32 %v339, %v29
    %341 = vst [vmem:[#allocation5] sm:$0xff] %v340
    %v342 = vmul.f32 %v184, %v340
    %s343 = scalar_lea.vmem [#allocation5], 8
    %344 = vst [vmem:[%s343] sm:$0xff] %v342
    %v345 = vmul.f32 %v184, %v342
    %v346 = vsub.f32 %v345, %v340
    %s347 = scalar_lea.vmem [#allocation5], 16
    %348 = vst [vmem:[%s347] sm:$0xff] %v346
    %v349 = vmul.f32 %v184, %v346
    %v350 = vsub.f32 %v349, %v342
    %s351 = scalar_lea.vmem [#allocation5], 24
    %352 = vst [vmem:[%s351] sm:$0xff] %v350
    %v353 = vmul.f32 %v184, %v350
    %v354 = vsub.f32 %v353, %v346
    %s355 = scalar_lea.vmem [#allocation5], 32
    %356 = vst [vmem:[%s355] sm:$0xff] %v354
    %v357 = vmul.f32 %v184, %v354
    %v358 = vsub.f32 %v357, %v350
    %s359 = scalar_lea.vmem [#allocation5], 40
    %360 = vst [vmem:[%s359] sm:$0xff] %v358
    %v361 = vmul.f32 %v184, %v358
    %v362 = vsub.f32 %v361, %v354
    %s363 = scalar_lea.vmem [#allocation5], 48
    %364 = vst [vmem:[%s363] sm:$0xff] %v362
    %v365 = vmul.f32 %v184, %v362
    %v366 = vsub.f32 %v365, %v358
    %s367 = scalar_lea.vmem [#allocation5], 56
    %368 = vst [vmem:[%s367] sm:$0xff] %v366
    // Predicated region
    $region10: #{tpu_custom_call.1} parent=1 // pred_check
      _
    $region11: #{tpu_custom_call.1} parent=1 // pred_check_branch
      %370 = sbr.rel (0) target = $region13
    $region12: #{tpu_custom_call.1} parent=1 // pred_region
      %372 = vsyncadd [#allocation4], 0
      %s373 = sshll.u32 [#allocation5], 4
      %s374 = int_to_ptr.vmem [resolvable:$true] %s373
      %s375 = sshll.u32 %s1, 4
      %s376 = int_to_ptr.hbm [resolvable:$true] %s375
      %381 = dma.vmem_to_hbm [thread:$0]  %s374, 1024, %s376, [#allocation4], 128, 128, 8
    $region13: #{tpu_custom_call.1} parent=1 // pred_fallthru
      _
    // Predicated region
    $region14: #{tpu_custom_call.1} parent=1 // pred_check
      _
    $region15: #{tpu_custom_call.1} parent=1 // pred_check_branch
      %383 = sbr.rel (0) target = $region17
    $region16: #{tpu_custom_call.1} parent=1 // pred_region
      %385 = dma.done [#allocation4], 1024
    $region17: #{tpu_custom_call.1} parent=1 // pred_fallthru
      _
    %386 = vsyncpa [#allocation3], 1
    %387 = vsyncpa [#allocation4], 1

</llo_original>
